<compile_context>
chip_gen: v6e
topology: v6e:2x2x1
jax: 0.10.0
libtpu: 0.0.40
codegen_flags: <defaults>
</compile_context>

<pallas_src>
import jax
import jax.numpy as jnp
from jax.experimental import pallas as pl
from jax.experimental.pallas import tpu as pltpu


def _floor_kernel(x_ref, o_ref):
    # Pure elementwise floor on the VMEM tile (single VPU op per vreg).
    o_ref[...] = jnp.floor(x_ref[...])


_MIN_LANE = 128
_LANE_CANDIDATES = (8192, 4096, 2048, 1024, 512, 256, 128)
# Max bytes per block: 4 MiB -> double-buffered in+out ~= 16 MiB, under the scoped VMEM
# limit requested below on every generation (v5e/v6e default 16/32 MiB, v7x 32 MiB).
_MAX_BLOCK_BYTES = 4 * 1024 * 1024
# Aim for at least this many grid steps so the pipeline stays full and v7x's two
# TensorCores each get several steps to double-buffer.
_MIN_GRID_STEPS = 8
_VMEM_LIMIT_BYTES = 32 * 1024 * 1024


def _sublane(itemsize: int) -> int:
    # f32 -> 8 rows/vreg, bf16/f16 -> 16, int8/fp8 -> 32.
    return 8 * max(1, 4 // itemsize)


def _pick_lane(n_elems: int, sublane: int) -> int:
    # Widest lane width (multiple of 128) dividing the slab while keeping at least one
    # full sublane group of rows (full vreg packing). n_elems is a multiple of 128.
    for cand in _LANE_CANDIDATES:
        if n_elems % cand == 0 and (n_elems // cand) >= sublane:
            return cand
    return _MIN_LANE


def _floor_2d(x2d: jax.Array, rows: int, lane: int, dtype, itemsize: int, sublane: int):
    row_bytes = lane * itemsize
    # Cap block size by VMEM budget (multiple of sublane rows).
    by_bytes = max(sublane, (_MAX_BLOCK_BYTES // row_bytes) // sublane * sublane)
    # Cap block size so the grid has >= _MIN_GRID_STEPS steps when possible.
    by_steps = max(sublane, pl.cdiv(pl.cdiv(rows, _MIN_GRID_STEPS), sublane) * sublane)
    # block_rows is either a multiple of `sublane` or equal to the full row extent,
    # so the (8,128) BlockSpec constraint is always satisfied; the trailing partial
    # block (if any) is boundary-masked by Pallas.
    block_rows = min(rows, by_bytes, by_steps)
    grid = (pl.cdiv(rows, block_rows),)
    total_bytes = rows * lane * itemsize

    return pl.pallas_call(
        _floor_kernel,
        out_shape=jax.ShapeDtypeStruct((rows, lane), dtype),
        grid_spec=pltpu.PrefetchScalarGridSpec(
            num_scalar_prefetch=0,
            grid=grid,
            in_specs=[pl.BlockSpec((block_rows, lane), lambda i: (i, 0))],
            out_specs=pl.BlockSpec((block_rows, lane), lambda i: (i, 0)),
        ),
        compiler_params=pltpu.CompilerParams(
            dimension_semantics=("parallel",),
            vmem_limit_bytes=_VMEM_LIMIT_BYTES,
        ),
        cost_estimate=pl.CostEstimate(
            flops=rows * lane,
            transcendentals=0,
            bytes_accessed=2 * total_bytes,
        ),
    )(x2d)


def floor_pallas(x: jax.Array) -> jax.Array:
    """Elementwise floor via a Pallas TPU kernel. Preserves shape & dtype."""
    if x.size == 0:
        return x
    dtype = x.dtype
    if not jnp.issubdtype(dtype, jnp.floating):
        # floor is the identity on integer/bool inputs (avoids jnp.floor's float promotion).
        return x

    orig_shape = x.shape
    itemsize = jnp.dtype(dtype).itemsize
    sublane = _sublane(itemsize)
    n = x.size

    x_flat = jnp.ravel(x)
    n_main = (n // _MIN_LANE) * _MIN_LANE  # aligned prefix (multiple of 128)
    tail = n - n_main                      # ragged remainder, always < 128 elements

    pieces = []
    if n_main:
        lane = _pick_lane(n_main, sublane)
        rows = n_main // lane
        x_main = x_flat if tail == 0 else x_flat[:n_main]
        main_out = _floor_2d(x_main.reshape(rows, lane), rows, lane, dtype, itemsize, sublane)
        if tail == 0:
            return main_out.reshape(orig_shape)
        pieces.append(main_out.reshape(-1))

    if tail:
        # <128-element tail: pad to one lane row and run a single tiny block.
        tail_pad = jnp.pad(x_flat[n_main:], (0, _MIN_LANE - tail))
        tail_out = pl.pallas_call(
            _floor_kernel,
            out_shape=jax.ShapeDtypeStruct((1, _MIN_LANE), dtype),
        )(tail_pad.reshape(1, _MIN_LANE))
        pieces.append(tail_out.reshape(-1)[:tail])

    out_flat = pieces[0] if len(pieces) == 1 else jnp.concatenate(pieces)
    return out_flat.reshape(orig_shape)


if __name__ == "__main__":
    key = jax.random.PRNGKey(0)
    # Rank-4 F32 input consistent with Floor_F32_R4 (NCHW), small shape.
    x = jax.random.normal(key, (2, 4, 16, 16), dtype=jnp.float32) * 5.0

    y = floor_pallas(x)
    jax.block_until_ready(y)

    # Sanity check against the reference semantics (torch.floor == jnp.floor).
    ref = jnp.floor(x)
    assert y.shape == x.shape and y.dtype == x.dtype
    assert bool(jnp.all(y == ref))

    print("KERNEL_OK")
</pallas_src>

<mosaic_0001>
module attributes {stable_mosaic.version = 11 : i64} {
  func.func @_floor_kernel(%arg0: i32, %arg1: memref<8x256xf32, #tpu.memory_space<vmem>>, %arg2: memref<8x256xf32, #tpu.memory_space<vmem>>) attributes {dimension_semantics = [#tpu.dimension_semantics<parallel>], iteration_bounds = array<i64: 1>, scalar_prefetch = 0 : i64, scratch_operands = 0 : i64, tpu.core_type = #tpu.core_type<tc>, window_params = [{transform_indices = @transform_0, window_bounds = array<i64: 8, 256>}, {transform_indices = @transform_1, window_bounds = array<i64: 8, 256>}]} {
    %c0 = arith.constant 0 : index
    %c0_0 = arith.constant 0 : index
    %0 = vector.load %arg1[%c0, %c0_0] : memref<8x256xf32, #tpu.memory_space<vmem>>, vector<8x256xf32>
    %1 = math.floor %0 : vector<8x256xf32>
    %c0_1 = arith.constant 0 : index
    %c0_2 = arith.constant 0 : index
    %2 = vector.load %arg2[%c0_1, %c0_2] : memref<8x256xf32, #tpu.memory_space<vmem>>, vector<8x256xf32>
    tpu.vector_store %arg2[%c0_1, %c0_2], %1 {strides = array<i32>} : memref<8x256xf32, #tpu.memory_space<vmem>>, vector<8x256xf32>,
    return
  }
  func.func @transform_0(%arg0: i32) -> (i32, i32) {
    %c0_i32 = arith.constant 0 : i32
    %c0_i32_0 = arith.constant 0 : i32
    return %arg0, %c0_i32 : i32, i32
  }
  func.func @transform_1(%arg0: i32) -> (i32, i32) {
    %c0_i32 = arith.constant 0 : i32
    %c0_i32_0 = arith.constant 0 : i32
    return %arg0, %c0_i32 : i32, i32
  }
}

</mosaic_0001>

<llo_original>
// kernel: tpu_custom_call.1
$region0: #{tpu_custom_call.1}
  #allocation0 [shape = 'u32[]', space=smem, size = 0x4, offset = 0x4, fixed_abs, tag = 'smem constant byte address 0x4 - core index']
  #allocation1 [shape = 'u32[144,128]{1,0:T(1,128)}', space=vmem, size = 0x12000, scoped, tag = 'internal scratch']
  %s0 = inlined_call_operand.hbm [shape: f32[8,256], index: 0, kind: input, shape index: {}]
  %s1 = inlined_call_operand.hbm [shape: f32[8,256], index: 1, kind: output, shape index: {}]
  %s2 = sld [smem:[#allocation0]]
  $region18: #{tpu_custom_call.1} parent=0
    _
  %s4 = ssub.s32 1, %s2
  %s5 = scalar_select 0, %s4, %s2
  $region1: #{tpu_custom_call.1} parent=0
    #allocation2 [shape = 'u8[8192]{0}', space=vmem, size = 0x2000, scoped, tag = 'input window, operand 0, single buffered']
    #allocation3 [shape = 's32[1]{0}', space=sflag, size = 0x4, scoped, tag = 'scoped memory for tpu_custom_call.1']
    #allocation4 [shape = 's32[1]{0}', space=sflag, size = 0x4, scoped, tag = 'scoped memory for tpu_custom_call.1']
    #allocation5 [shape = 'u8[8192]{0}', space=vmem, size = 0x2000, scoped, tag = 'output window, operand 0, single buffered']
    %6 = vsyncpa [#allocation3], 0
    %7 = vsyncpa [#allocation4], 0
    // Predicated region
    $region2: #{tpu_custom_call.1} parent=1 // pred_check
      _
    $region3: #{tpu_custom_call.1} parent=1 // pred_check_branch
      %9 = sbr.rel (0) target = $region5
    $region4: #{tpu_custom_call.1} parent=1 // pred_region
      %s11 = ssub.s32 256, 256
      %12 = vsyncadd [#allocation3], %s11
      %s14 = sshll.u32 [#allocation2], 4
      %s15 = int_to_ptr.vmem [resolvable:$true] %s14
      %17 = dma.hbm_to_vmem [thread:$0]  %s0, 256, %s15, [#allocation3]
    $region5: #{tpu_custom_call.1} parent=1 // pred_fallthru
      _
    // Predicated region
    $region6: #{tpu_custom_call.1} parent=1 // pred_check
      _
    $region7: #{tpu_custom_call.1} parent=1 // pred_check_branch
      %19 = sbr.rel (0) target = $region9
    $region8: #{tpu_custom_call.1} parent=1 // pred_region
      %20 = dma.done [#allocation3], 256
    $region9: #{tpu_custom_call.1} parent=1 // pred_fallthru
      _
    %v21 = vld [vmem:[#allocation2] sm:$0xff]
    %v22 = vld [vmem:[#allocation2 + $0x8] sm:$0xff]
    %v23 = vfloor.f32 %v21
    %v24 = vfloor.f32 %v22
    %25 = vst [vmem:[#allocation5] sm:$0xff] %v23
    %26 = vst [vmem:[#allocation5 + $0x8] sm:$0xff] %v24
    // Predicated region
    $region10: #{tpu_custom_call.1} parent=1 // pred_check
      _
    $region11: #{tpu_custom_call.1} parent=1 // pred_check_branch
      %28 = sbr.rel (0) target = $region13
    $region12: #{tpu_custom_call.1} parent=1 // pred_region
      %s30 = ssub.s32 256, 256
      %31 = vsyncadd [#allocation4], %s30
      %s33 = sshll.u32 [#allocation5], 4
      %s34 = int_to_ptr.vmem [resolvable:$true] %s33
      %36 = dma.vmem_to_hbm [thread:$0]  %s34, 256, %s1, [#allocation4]
    $region13: #{tpu_custom_call.1} parent=1 // pred_fallthru
      _
    // Predicated region
    $region14: #{tpu_custom_call.1} parent=1 // pred_check
      _
    $region15: #{tpu_custom_call.1} parent=1 // pred_check_branch
      %38 = sbr.rel (0) target = $region17
    $region16: #{tpu_custom_call.1} parent=1 // pred_region
      %39 = dma.done [#allocation4], 256
    $region17: #{tpu_custom_call.1} parent=1 // pred_fallthru
      _
    %40 = vsyncpa [#allocation3], 1
    %41 = vsyncpa [#allocation4], 1

</llo_original>
